<compile_context>
chip_gen: v7x
topology: tpu7x:2x2x1
jax: 0.10.0
libtpu: 0.0.40
codegen_flags: <defaults>
</compile_context>

<pallas_src>
from typing import NamedTuple

import jax
import jax.numpy as jnp
from jax.experimental import pallas as pl
from jax.experimental.pallas import tpu as pltpu

_LANE = 128                # lane width: last dim of every tile padded to this
_SUBLANE = 8               # sublane granularity for the batch dim
_MAX_TILE_B = 512          # upper bound on batch tile rows
_VMEM_HEADROOM = 0.85      # fraction of physical VMEM the kernel may use
_RESIDENT_WEIGHT_FRAC = 0.5  # resident weights above this fraction -> streamed path


def _round_up(n: int, m: int) -> int:
    return ((n + m - 1) // m) * m


def _cdiv(a: int, b: int) -> int:
    return -(-a // b)


def _usable_vmem_bytes() -> int:
    """Generation-aware usable VMEM (per TensorCore) with headroom."""
    cap = None
    try:
        info = pltpu.get_tpu_info()
        cap = getattr(info, "vmem_capacity_bytes", None)
    except Exception:
        cap = None
    if not cap:
        cap = 64 * 1024 * 1024   # conservative v7x per-TC floor
    return int(cap * _VMEM_HEADROOM)


# ----------------------------------------------------------------------------
# Parameter preparation (pad / cast ONCE, at init time)
# ----------------------------------------------------------------------------
class PreparedExpert(NamedTuple):
    layers: tuple          # ((w_pad, b_pad), ...) lane-dense, in compute dtype
    dims: tuple            # original feature dims: (dim_in, *hidden, dim_out)
    dims_pad: tuple        # lane-padded feature dims
    compute_dtype: jnp.dtype


def prepare_expert_params(params, compute_dtype=None) -> PreparedExpert:
    """Pad weights/biases to lane-dense shapes and cast to the compute dtype ONCE.

    Call this at init/conversion time; re-padding per forward call would add a
    full HBM read+write of every operand per call (this MLP is memory-bound).
    """
    dims = [params[0][0].shape[0]] + [w.shape[1] for w, _ in params]
    dims_pad = [_round_up(d, _LANE) for d in dims]
    cdt = jnp.dtype(compute_dtype) if compute_dtype is not None else jnp.dtype(params[0][0].dtype)

    layers = []
    for li, (w, b) in enumerate(params):
        d_in, d_out = w.shape
        d_in_p, d_out_p = dims_pad[li], dims_pad[li + 1]
        w_p = jnp.asarray(w, cdt)
        if (d_in, d_out) != (d_in_p, d_out_p):
            w_p = jnp.pad(w_p, ((0, d_in_p - d_in), (0, d_out_p - d_out)))
        b_p = jnp.asarray(b, cdt).reshape(1, -1)
        if d_out != d_out_p:
            b_p = jnp.pad(b_p, ((0, 0), (0, d_out_p - d_out)))
        layers.append((w_p, b_p))
    return PreparedExpert(tuple(layers), tuple(dims), tuple(dims_pad), cdt)


# ----------------------------------------------------------------------------
# Fused path: all layers' weights resident in VMEM, grid over the batch
# ----------------------------------------------------------------------------
def _make_fused_kernel(num_layers: int, compute_dtype):
    def kernel(*refs):
        # refs = (x_ref, w0, b0, w1, b1, ..., out_ref)
        x_ref, out_ref = refs[0], refs[-1]
        h = x_ref[...]                                   # native-dtype MXU operand
        for i in range(num_layers):
            w = refs[1 + 2 * i][...]
            b = refs[2 + 2 * i][...]
            acc = jnp.dot(h, w, preferred_element_type=jnp.float32)   # MXU, f32 acc
            acc = jnp.maximum(acc + b.astype(jnp.float32), 0.0)       # VPU bias + ReLU
            # Dropout (eval mode) == identity.
            h = acc.astype(compute_dtype)
        out_ref[...] = h.astype(out_ref.dtype)
    return kernel


def _resident_spec(shape, single_buffer: bool):
    """Constant-index (VMEM-resident) spec; single-buffered when supported."""
    idx = lambda i: (0, 0)
    if single_buffer and hasattr(pl, "Buffered"):
        try:
            return pl.BlockSpec(shape, idx, pipeline_mode=pl.Buffered(1))
        except TypeError:
            pass
    return pl.BlockSpec(shape, idx)


def _fused_forward(x_p, prep: PreparedExpert, tile_b: int, n_tiles: int,
                   out_dtype, single_buffer_weights: bool, usable_vmem: int):
    num_layers = len(prep.layers)
    dims_pad = prep.dims_pad
    batch_pad = x_p.shape[0]
    elt = jnp.dtype(prep.compute_dtype).itemsize
    out_elt = jnp.dtype(out_dtype).itemsize

    in_specs = [pl.BlockSpec((tile_b, dims_pad[0]), lambda i: (i, 0))]
    flat_inputs = [x_p]
    for w_p, b_p in prep.layers:
        flat_inputs += [w_p, b_p]
        in_specs += [_resident_spec(w_p.shape, single_buffer_weights),
                     _resident_spec(b_p.shape, single_buffer_weights)]

    # --- VMEM budget: resident weights (x buffer count) + activation tiles ---
    weight_bufs = 1 if single_buffer_weights else 2
    weight_bytes = sum(w.size + b.size for w, b in prep.layers) * elt * weight_bufs
    act_bytes = tile_b * (2 * dims_pad[0] * elt + 2 * dims_pad[-1] * out_elt
                          + max(dims_pad[1:]) * (4 + elt))
    vmem_limit = int(min(usable_vmem,
                         max(32 * 1024 * 1024, int(1.25 * (weight_bytes + act_bytes)))))

    flops = 2 * batch_pad * sum(dims_pad[i] * dims_pad[i + 1] for i in range(num_layers))
    bytes_accessed = (x_p.size * elt
                      + sum(w.size + b.size for w, b in prep.layers) * elt
                      + batch_pad * dims_pad[-1] * out_elt)

    fn = pl.pallas_call(
        _make_fused_kernel(num_layers, prep.compute_dtype),
        out_shape=jax.ShapeDtypeStruct((batch_pad, dims_pad[-1]), out_dtype),
        grid=(n_tiles,),
        in_specs=in_specs,
        out_specs=pl.BlockSpec((tile_b, dims_pad[-1]), lambda i: (i, 0)),
        compiler_params=pltpu.CompilerParams(
            dimension_semantics=("parallel",),          # megacore split over batch tiles
            vmem_limit_bytes=vmem_limit,
        ),
        cost_estimate=pl.CostEstimate(flops=flops, transcendentals=0,
                                      bytes_accessed=bytes_accessed),
    )
    return fn(*flat_inputs)


# ----------------------------------------------------------------------------
# Streamed path: per-layer tiled matmul with a K-reduction grid axis
# (for experts whose resident weights would not fit per-TC VMEM, e.g. v7x 64 MiB)
# ----------------------------------------------------------------------------
def _linear_relu_kernel(x_ref, w_ref, b_ref, o_ref, acc_ref):
    @pl.when(pl.program_id(2) == 0)
    def _init():
        acc_ref[...] = jnp.zeros_like(acc_ref)

    acc_ref[...] += jnp.dot(x_ref[...], w_ref[...], preferred_element_type=jnp.float32)

    @pl.when(pl.program_id(2) == pl.num_programs(2) - 1)
    def _finalize():
        acc = acc_ref[...] + b_ref[...].astype(jnp.float32)
        o_ref[...] = jnp.maximum(acc, 0.0).astype(o_ref.dtype)   # Dropout(eval) == id


def _pick_divisor_tile(dim_pad: int, max_tile: int = 512) -> int:
    start = (min(max_tile, dim_pad) // _LANE) * _LANE
    for t in range(start, _LANE - 1, -_LANE):
        if dim_pad % t == 0:
            return t
    return dim_pad


def _streamed_layer(h, w_p, b_p, out_dtype, tile_m: int):
    M, K = h.shape
    Kw, N = w_p.shape
    assert K == Kw
    tm = tile_m
    tk = _pick_divisor_tile(K)
    tn = _pick_divisor_tile(N)
    grid = (M // tm, N // tn, K // tk)

    flops = 2 * M * K * N
    bytes_accessed = (M * K * h.dtype.itemsize + K * N * w_p.dtype.itemsize
                      + N * b_p.dtype.itemsize + M * N * jnp.dtype(out_dtype).itemsize)

    return pl.pallas_call(
        _linear_relu_kernel,
        out_shape=jax.ShapeDtypeStruct((M, N), out_dtype),
        grid=grid,
        in_specs=[
            pl.BlockSpec((tm, tk), lambda i, j, k: (i, k)),
            pl.BlockSpec((tk, tn), lambda i, j, k: (k, j)),
            pl.BlockSpec((1, tn), lambda i, j, k: (0, j)),
        ],
        out_specs=pl.BlockSpec((tm, tn), lambda i, j, k: (i, j)),
        scratch_shapes=[pltpu.VMEM((tm, tn), jnp.float32)],
        compiler_params=pltpu.CompilerParams(
            dimension_semantics=("parallel", "parallel", "arbitrary")),
        cost_estimate=pl.CostEstimate(flops=flops, transcendentals=0,
                                      bytes_accessed=bytes_accessed),
    )(h, w_p, b_p)


# ----------------------------------------------------------------------------
# Tiling choice & top-level forward
# ----------------------------------------------------------------------------
def _choose_batch_tiling(batch: int, max_tile_rows: int):
    """tile_b in [256, 512] when possible, minimal padding, even grid (megacore)."""
    batch8 = _round_up(max(batch, 1), _SUBLANE)
    max_tile = max(_SUBLANE, (min(max_tile_rows, _MAX_TILE_B) // _SUBLANE) * _SUBLANE)
    if batch8 <= max_tile:
        return batch8, 1
    n_tiles = _cdiv(batch8, max_tile)
    if n_tiles % 2:
        n_tiles += 1                       # even grid -> balanced v7x megacore split
    tile_b = min(max_tile, _round_up(_cdiv(batch8, n_tiles), _SUBLANE))
    return tile_b, n_tiles


def expert_forward(x: jax.Array, params, *, tile_b: int | None = None,
                   force_streamed: bool = False) -> jax.Array:
    """Expert forward pass (Linear -> ReLU -> Dropout[eval]) per layer, fused on TPU."""
    if not isinstance(params, PreparedExpert):
        # Convenience path; prefer calling prepare_expert_params() once at init.
        params = prepare_expert_params(params)
    prep = params

    num_layers = len(prep.layers)
    batch, dim_in = x.shape
    assert dim_in == prep.dims[0], (dim_in, prep.dims[0])
    dims_pad = prep.dims_pad
    out_dtype = x.dtype
    cdt = prep.compute_dtype
    elt = jnp.dtype(cdt).itemsize
    out_elt = jnp.dtype(out_dtype).itemsize

    usable = _usable_vmem_bytes()
    weight_bytes_1x = sum(w.size + b.size for w, b in prep.layers) * elt
    use_streamed = force_streamed or (weight_bytes_1x > _RESIDENT_WEIGHT_FRAC * usable)

    if use_streamed:
        max_tile_rows = _MAX_TILE_B
    else:
        row_bytes = (2 * dims_pad[0] * elt + 2 * dims_pad[-1] * out_elt
                     + max(dims_pad[1:]) * (4 + elt))
        max_tile_rows = max(_SUBLANE, (usable - weight_bytes_1x) // row_bytes)

    if tile_b is not None:
        tile_b = _round_up(tile_b, _SUBLANE)
        n_tiles = _cdiv(_round_up(batch, _SUBLANE), tile_b)
    else:
        tile_b, n_tiles = _choose_batch_tiling(batch, max_tile_rows)
    batch_pad = tile_b * n_tiles

    # Pad / cast the activation input only when actually needed.
    d_in_pad = dims_pad[0]
    x_p = x.astype(cdt)
    if batch_pad != batch or d_in_pad != dim_in:
        x_p = jnp.pad(x_p, ((0, batch_pad - batch), (0, d_in_pad - dim_in)))

    if use_streamed:
        # Streamed weights: per-layer matmul with K-reduction grid (v7x-sized experts).
        h = x_p
        for li, (w_p, b_p) in enumerate(prep.layers):
            layer_dtype = cdt if li + 1 < num_layers else out_dtype
            h = _streamed_layer(h, w_p, b_p, layer_dtype, tile_b)
        out_p = h
    else:
        try:
            out_p = _fused_forward(x_p, prep, tile_b, n_tiles, out_dtype,
                                   single_buffer_weights=True, usable_vmem=usable)
        except Exception:
            # Fallback if single-buffered (pl.Buffered(1)) specs are unsupported.
            out_p = _fused_forward(x_p, prep, tile_b, n_tiles, out_dtype,
                                   single_buffer_weights=False, usable_vmem=usable)

    d_out, d_out_pad = prep.dims[-1], dims_pad[-1]
    if batch_pad != batch and d_out_pad != d_out:
        return out_p[:batch, :d_out]
    if batch_pad != batch:
        return out_p[:batch]
    if d_out_pad != d_out:
        return out_p[:, :d_out]
    return out_p   # already dense & aligned: no extra HBM copy


# ----------------------------------------------------------------------------
# Param init (mimics nn.Linear) and pure-JAX reference
# ----------------------------------------------------------------------------
def init_expert_params(key, dim_in: int, dim_out: int, dim_hidden=None,
                       dtype=jnp.float32):
    dim_hidden = [] if not dim_hidden else list(dim_hidden)
    dims = [dim_in, *dim_hidden, dim_out]
    params = []
    for i in range(1, len(dims)):
        d_in, d_out = dims[i - 1], dims[i]
        key, kw, kb = jax.random.split(key, 3)
        bound = 1.0 / (d_in ** 0.5)
        # PyTorch stores W as (d_out, d_in); we keep the transposed (d_in, d_out)
        # layout so the kernel computes y = x @ W + b (lane-dense output).
        w = jax.random.uniform(kw, (d_in, d_out), dtype, minval=-bound, maxval=bound)
        b = jax.random.uniform(kb, (1, d_out), dtype, minval=-bound, maxval=bound)
        params.append((w, b))
    return params


def expert_reference(x, params):
    h = x.astype(jnp.float32)
    for w, b in params:
        h = jnp.maximum(
            jnp.dot(h, w.astype(jnp.float32), precision=jax.lax.Precision.HIGHEST)
            + b.astype(jnp.float32).reshape(1, -1), 0.0)
    return h.astype(x.dtype)


if __name__ == "__main__":
    key = jax.random.PRNGKey(0)
    kx, kp, kx2, kp2, kx3, kp3 = jax.random.split(key, 6)

    # --- 1) small shapes: single batch tile, feature dims need lane padding ---
    batch, dim_in, dim_hidden, dim_out = 8, 32, [64, 32], 16
    x = jax.random.normal(kx, (batch, dim_in), jnp.float32)
    params = init_expert_params(kp, dim_in, dim_out, dim_hidden)
    prep = prepare_expert_params(params)          # pad/cast ONCE, not per call
    ref = expert_reference(x, params)

    out = jax.block_until_ready(expert_forward(x, prep))
    assert out.shape == (batch, dim_out), out.shape
    assert jnp.allclose(out, ref, atol=1e-5, rtol=1e-5), "mismatch (small fused)"

    # --- 2) forced streamed-weight path on the same small problem ---
    out_s = jax.block_until_ready(expert_forward(x, prep, force_streamed=True))
    assert jnp.allclose(out_s, ref, atol=1e-5, rtol=1e-5), "mismatch (small streamed)"

    # --- 3) multi-tile batch: batch grid, even megacore split, minimal padding ---
    batch2, dim_in2, dim_hidden2, dim_out2 = 1048, 256, [512], 128
    x2 = jax.random.normal(kx2, (batch2, dim_in2), jnp.float32)
    params2 = init_expert_params(kp2, dim_in2, dim_out2, dim_hidden2)
    prep2 = prepare_expert_params(params2)
    ref2 = expert_reference(x2, params2)

    out2 = jax.block_until_ready(expert_forward(x2, prep2))
    assert out2.shape == (batch2, dim_out2), out2.shape
    assert jnp.allclose(out2, ref2, atol=1e-4, rtol=1e-4), "mismatch (tiled fused)"

    # --- 4) bf16 operand path (f32 MXU accumulation, f32 output) ---
    prep2_bf16 = prepare_expert_params(params2, compute_dtype=jnp.bfloat16)
    out2_bf = jax.block_until_ready(expert_forward(x2, prep2_bf16))
    assert out2_bf.shape == (batch2, dim_out2), out2_bf.shape
    assert jnp.allclose(out2_bf, ref2, atol=5e-2, rtol=5e-2), "mismatch (bf16 fused)"

    # --- 5) streamed path with a real K-reduction grid (K=1024 -> 2 K-tiles) ---
    batch3, dim_in3, dim_out3 = 64, 1024, 256
    x3 = jax.random.normal(kx3, (batch3, dim_in3), jnp.float32)
    params3 = init_expert_params(kp3, dim_in3, dim_out3, None)
    prep3 = prepare_expert_params(params3)
    ref3 = expert_reference(x3, params3)
    out3 = jax.block_until_ready(expert_forward(x3, prep3, force_streamed=True))
    assert out3.shape == (batch3, dim_out3), out3.shape
    assert jnp.allclose(out3, ref3, atol=1e-3, rtol=1e-3), "mismatch (streamed K-grid)"

    print("KERNEL_OK")
</pallas_src>

<mosaic_0001>
module attributes {stable_mosaic.version = 11 : i64} {
  func.func @kernel(%arg0: i32, %arg1: memref<8x128xf32, #tpu.memory_space<vmem>>, %arg2: memref<128x128xf32, #tpu.memory_space<vmem>>, %arg3: memref<1x128xf32, #tpu.memory_space<vmem>>, %arg4: memref<128x128xf32, #tpu.memory_space<vmem>>, %arg5: memref<1x128xf32, #tpu.memory_space<vmem>>, %arg6: memref<128x128xf32, #tpu.memory_space<vmem>>, %arg7: memref<1x128xf32, #tpu.memory_space<vmem>>, %arg8: memref<8x128xf32, #tpu.memory_space<vmem>>) attributes {dimension_semantics = [#tpu.dimension_semantics<parallel>], iteration_bounds = array<i64: 1>, scalar_prefetch = 0 : i64, scratch_operands = 0 : i64, tpu.core_type = #tpu.core_type<tc>, window_params = [{transform_indices = @transform_0, window_bounds = array<i64: 8, 128>}, {pipeline_mode = #tpu.pipeline_mode<synchronous>, transform_indices = @transform_1, window_bounds = array<i64: 128, 128>}, {pipeline_mode = #tpu.pipeline_mode<synchronous>, transform_indices = @transform_2, window_bounds = array<i64: 1, 128>}, {pipeline_mode = #tpu.pipeline_mode<synchronous>, transform_indices = @transform_3, window_bounds = array<i64: 128, 128>}, {pipeline_mode = #tpu.pipeline_mode<synchronous>, transform_indices = @transform_4, window_bounds = array<i64: 1, 128>}, {pipeline_mode = #tpu.pipeline_mode<synchronous>, transform_indices = @transform_5, window_bounds = array<i64: 128, 128>}, {pipeline_mode = #tpu.pipeline_mode<synchronous>, transform_indices = @transform_6, window_bounds = array<i64: 1, 128>}, {transform_indices = @transform_7, window_bounds = array<i64: 8, 128>}]} {
    %c0 = arith.constant 0 : index
    %c0_0 = arith.constant 0 : index
    %0 = vector.load %arg1[%c0, %c0_0] : memref<8x128xf32, #tpu.memory_space<vmem>>, vector<8x128xf32>
    %c0_1 = arith.constant 0 : index
    %c0_2 = arith.constant 0 : index
    %1 = vector.load %arg2[%c0_1, %c0_2] : memref<128x128xf32, #tpu.memory_space<vmem>>, vector<128x128xf32>
    %c0_3 = arith.constant 0 : index
    %c0_4 = arith.constant 0 : index
    %2 = vector.load %arg3[%c0_3, %c0_4] : memref<1x128xf32, #tpu.memory_space<vmem>>, vector<1x128xf32>
    %cst = arith.constant dense<0.000000e+00> : vector<8x128xf32>
    %3 = tpu.matmul %0, %1, %cst {dimension_numbers = #tpu.dot_dimension_numbers<[1], [0], [0], [1], [0, 0, 1, 1], [], []>} : vector<8x128xf32>, vector<128x128xf32>, vector<8x128xf32> -> vector<8x128xf32>
    %4 = vector.broadcast %2 : vector<1x128xf32> to vector<8x128xf32>
    %5 = arith.addf %3, %4 : vector<8x128xf32>
    %cst_5 = arith.constant 0.000000e+00 : f32
    %6 = vector.broadcast %cst_5 : f32 to vector<8x128xf32>
    %7 = arith.maximumf %5, %6 : vector<8x128xf32>
    %c0_6 = arith.constant 0 : index
    %c0_7 = arith.constant 0 : index
    %8 = vector.load %arg4[%c0_6, %c0_7] : memref<128x128xf32, #tpu.memory_space<vmem>>, vector<128x128xf32>
    %c0_8 = arith.constant 0 : index
    %c0_9 = arith.constant 0 : index
    %9 = vector.load %arg5[%c0_8, %c0_9] : memref<1x128xf32, #tpu.memory_space<vmem>>, vector<1x128xf32>
    %cst_10 = arith.constant dense<0.000000e+00> : vector<8x128xf32>
    %10 = tpu.matmul %7, %8, %cst_10 {dimension_numbers = #tpu.dot_dimension_numbers<[1], [0], [0], [1], [0, 0, 1, 1], [], []>} : vector<8x128xf32>, vector<128x128xf32>, vector<8x128xf32> -> vector<8x128xf32>
    %11 = vector.broadcast %9 : vector<1x128xf32> to vector<8x128xf32>
    %12 = arith.addf %10, %11 : vector<8x128xf32>
    %cst_11 = arith.constant 0.000000e+00 : f32
    %13 = vector.broadcast %cst_11 : f32 to vector<8x128xf32>
    %14 = arith.maximumf %12, %13 : vector<8x128xf32>
    %c0_12 = arith.constant 0 : index
    %c0_13 = arith.constant 0 : index
    %15 = vector.load %arg6[%c0_12, %c0_13] : memref<128x128xf32, #tpu.memory_space<vmem>>, vector<128x128xf32>
    %c0_14 = arith.constant 0 : index
    %c0_15 = arith.constant 0 : index
    %16 = vector.load %arg7[%c0_14, %c0_15] : memref<1x128xf32, #tpu.memory_space<vmem>>, vector<1x128xf32>
    %cst_16 = arith.constant dense<0.000000e+00> : vector<8x128xf32>
    %17 = tpu.matmul %14, %15, %cst_16 {dimension_numbers = #tpu.dot_dimension_numbers<[1], [0], [0], [1], [0, 0, 1, 1], [], []>} : vector<8x128xf32>, vector<128x128xf32>, vector<8x128xf32> -> vector<8x128xf32>
    %18 = vector.broadcast %16 : vector<1x128xf32> to vector<8x128xf32>
    %19 = arith.addf %17, %18 : vector<8x128xf32>
    %cst_17 = arith.constant 0.000000e+00 : f32
    %20 = vector.broadcast %cst_17 : f32 to vector<8x128xf32>
    %21 = arith.maximumf %19, %20 : vector<8x128xf32>
    %c0_18 = arith.constant 0 : index
    %c0_19 = arith.constant 0 : index
    %22 = vector.load %arg8[%c0_18, %c0_19] : memref<8x128xf32, #tpu.memory_space<vmem>>, vector<8x128xf32>
    tpu.vector_store %arg8[%c0_18, %c0_19], %21 {strides = array<i32>} : memref<8x128xf32, #tpu.memory_space<vmem>>, vector<8x128xf32>,
    return
  }
  func.func @transform_0(%arg0: i32) -> (i32, i32) {
    %c0_i32 = arith.constant 0 : i32
    %c0_i32_0 = arith.constant 0 : i32
    return %arg0, %c0_i32 : i32, i32
  }
  func.func @transform_1(%arg0: i32) -> (i32, i32) {
    %c0_i32 = arith.constant 0 : i32
    %c0_i32_0 = arith.constant 0 : i32
    %c0_i32_1 = arith.constant 0 : i32
    return %c0_i32, %c0_i32_0 : i32, i32
  }
  func.func @transform_2(%arg0: i32) -> (i32, i32) {
    %c0_i32 = arith.constant 0 : i32
    %c0_i32_0 = arith.constant 0 : i32
    %c0_i32_1 = arith.constant 0 : i32
    return %c0_i32, %c0_i32_0 : i32, i32
  }
  func.func @transform_3(%arg0: i32) -> (i32, i32) {
    %c0_i32 = arith.constant 0 : i32
    %c0_i32_0 = arith.constant 0 : i32
    %c0_i32_1 = arith.constant 0 : i32
    return %c0_i32, %c0_i32_0 : i32, i32
  }
  func.func @transform_4(%arg0: i32) -> (i32, i32) {
    %c0_i32 = arith.constant 0 : i32
    %c0_i32_0 = arith.constant 0 : i32
    %c0_i32_1 = arith.constant 0 : i32
    return %c0_i32, %c0_i32_0 : i32, i32
  }
  func.func @transform_5(%arg0: i32) -> (i32, i32) {
    %c0_i32 = arith.constant 0 : i32
    %c0_i32_0 = arith.constant 0 : i32
    %c0_i32_1 = arith.constant 0 : i32
    return %c0_i32, %c0_i32_0 : i32, i32
  }
  func.func @transform_6(%arg0: i32) -> (i32, i32) {
    %c0_i32 = arith.constant 0 : i32
    %c0_i32_0 = arith.constant 0 : i32
    %c0_i32_1 = arith.constant 0 : i32
    return %c0_i32, %c0_i32_0 : i32, i32
  }
  func.func @transform_7(%arg0: i32) -> (i32, i32) {
    %c0_i32 = arith.constant 0 : i32
    %c0_i32_0 = arith.constant 0 : i32
    return %arg0, %c0_i32 : i32, i32
  }
}

module attributes {stable_mosaic.version = 11 : i64} {
  func.func @kernel(%arg0: i32, %arg1: memref<8x128xf32, #tpu.memory_space<vmem>>, %arg2: memref<128x128xf32, #tpu.memory_space<vmem>>, %arg3: memref<1x128xf32, #tpu.memory_space<vmem>>, %arg4: memref<128x128xf32, #tpu.memory_space<vmem>>, %arg5: memref<1x128xf32, #tpu.memory_space<vmem>>, %arg6: memref<128x128xf32, #tpu.memory_space<vmem>>, %arg7: memref<1x128xf32, #tpu.memory_space<vmem>>, %arg8: memref<8x128xf32, #tpu.memory_space<vmem>>) attributes {dimension_semantics = [#tpu.dimension_semantics<parallel>], iteration_bounds = array<i64: 1>, scalar_prefetch = 0 : i64, scratch_operands = 0 : i64, tpu.core_type = #tpu.core_type<tc>, window_params = [{transform_indices = @transform_0, window_bounds = array<i64: 8, 128>}, {pipeline_mode = #tpu.pipeline_mode<synchronous>, transform_indices = @transform_1, window_bounds = array<i64: 128, 128>}, {pipeline_mode = #tpu.pipeline_mode<synchronous>, transform_indices = @transform_2, window_bounds = array<i64: 1, 128>}, {pipeline_mode = #tpu.pipeline_mode<synchronous>, transform_indices = @transform_3, window_bounds = array<i64: 128, 128>}, {pipeline_mode = #tpu.pipeline_mode<synchronous>, transform_indices = @transform_4, window_bounds = array<i64: 1, 128>}, {pipeline_mode = #tpu.pipeline_mode<synchronous>, transform_indices = @transform_5, window_bounds = array<i64: 128, 128>}, {pipeline_mode = #tpu.pipeline_mode<synchronous>, transform_indices = @transform_6, window_bounds = array<i64: 1, 128>}, {transform_indices = @transform_7, window_bounds = array<i64: 8, 128>}]} {
    %c0 = arith.constant 0 : index
    %c0_0 = arith.constant 0 : index
    %0 = vector.load %arg1[%c0, %c0_0] : memref<8x128xf32, #tpu.memory_space<vmem>>, vector<8x128xf32>
    %c0_1 = arith.constant 0 : index
    %c0_2 = arith.constant 0 : index
    %1 = vector.load %arg2[%c0_1, %c0_2] : memref<128x128xf32, #tpu.memory_space<vmem>>, vector<128x128xf32>
    %c0_3 = arith.constant 0 : index
    %c0_4 = arith.constant 0 : index
    %2 = vector.load %arg3[%c0_3, %c0_4] : memref<1x128xf32, #tpu.memory_space<vmem>>, vector<1x128xf32>
    %cst = arith.constant dense<0.000000e+00> : vector<8x128xf32>
    %3 = tpu.matmul %0, %1, %cst {dimension_numbers = #tpu.dot_dimension_numbers<[1], [0], [0], [1], [0, 0, 1, 1], [], []>} : vector<8x128xf32>, vector<128x128xf32>, vector<8x128xf32> -> vector<8x128xf32>
    %4 = vector.broadcast %2 : vector<1x128xf32> to vector<8x128xf32>
    %5 = arith.addf %3, %4 : vector<8x128xf32>
    %cst_5 = arith.constant 0.000000e+00 : f32
    %6 = vector.broadcast %cst_5 : f32 to vector<8x128xf32>
    %7 = arith.maximumf %5, %6 : vector<8x128xf32>
    %c0_6 = arith.constant 0 : index
    %c0_7 = arith.constant 0 : index
    %8 = vector.load %arg4[%c0_6, %c0_7] : memref<128x128xf32, #tpu.memory_space<vmem>>, vector<128x128xf32>
    %c0_8 = arith.constant 0 : index
    %c0_9 = arith.constant 0 : index
    %9 = vector.load %arg5[%c0_8, %c0_9] : memref<1x128xf32, #tpu.memory_space<vmem>>, vector<1x128xf32>
    %cst_10 = arith.constant dense<0.000000e+00> : vector<8x128xf32>
    %10 = tpu.matmul %7, %8, %cst_10 {dimension_numbers = #tpu.dot_dimension_numbers<[1], [0], [0], [1], [0, 0, 1, 1], [], []>} : vector<8x128xf32>, vector<128x128xf32>, vector<8x128xf32> -> vector<8x128xf32>
    %11 = vector.broadcast %9 : vector<1x128xf32> to vector<8x128xf32>
    %12 = arith.addf %10, %11 : vector<8x128xf32>
    %cst_11 = arith.constant 0.000000e+00 : f32
    %13 = vector.broadcast %cst_11 : f32 to vector<8x128xf32>
    %14 = arith.maximumf %12, %13 : vector<8x128xf32>
    %c0_12 = arith.constant 0 : index
    %c0_13 = arith.constant 0 : index
    %15 = vector.load %arg6[%c0_12, %c0_13] : memref<128x128xf32, #tpu.memory_space<vmem>>, vector<128x128xf32>
    %c0_14 = arith.constant 0 : index
    %c0_15 = arith.constant 0 : index
    %16 = vector.load %arg7[%c0_14, %c0_15] : memref<1x128xf32, #tpu.memory_space<vmem>>, vector<1x128xf32>
    %cst_16 = arith.constant dense<0.000000e+00> : vector<8x128xf32>
    %17 = tpu.matmul %14, %15, %cst_16 {dimension_numbers = #tpu.dot_dimension_numbers<[1], [0], [0], [1], [0, 0, 1, 1], [], []>} : vector<8x128xf32>, vector<128x128xf32>, vector<8x128xf32> -> vector<8x128xf32>
    %18 = vector.broadcast %16 : vector<1x128xf32> to vector<8x128xf32>
    %19 = arith.addf %17, %18 : vector<8x128xf32>
    %cst_17 = arith.constant 0.000000e+00 : f32
    %20 = vector.broadcast %cst_17 : f32 to vector<8x128xf32>
    %21 = arith.maximumf %19, %20 : vector<8x128xf32>
    %c0_18 = arith.constant 0 : index
    %c0_19 = arith.constant 0 : index
    %22 = vector.load %arg8[%c0_18, %c0_19] : memref<8x128xf32, #tpu.memory_space<vmem>>, vector<8x128xf32>
    tpu.vector_store %arg8[%c0_18, %c0_19], %21 {strides = array<i32>} : memref<8x128xf32, #tpu.memory_space<vmem>>, vector<8x128xf32>,
    return
  }
  func.func @transform_0(%arg0: i32) -> (i32, i32) {
    %c0_i32 = arith.constant 0 : i32
    %c0_i32_0 = arith.constant 0 : i32
    return %arg0, %c0_i32 : i32, i32
  }
  func.func @transform_1(%arg0: i32) -> (i32, i32) {
    %c0_i32 = arith.constant 0 : i32
    %c0_i32_0 = arith.constant 0 : i32
    %c0_i32_1 = arith.constant 0 : i32
    return %c0_i32, %c0_i32_0 : i32, i32
  }
  func.func @transform_2(%arg0: i32) -> (i32, i32) {
    %c0_i32 = arith.constant 0 : i32
    %c0_i32_0 = arith.constant 0 : i32
    %c0_i32_1 = arith.constant 0 : i32
    return %c0_i32, %c0_i32_0 : i32, i32
  }
  func.func @transform_3(%arg0: i32) -> (i32, i32) {
    %c0_i32 = arith.constant 0 : i32
    %c0_i32_0 = arith.constant 0 : i32
    %c0_i32_1 = arith.constant 0 : i32
    return %c0_i32, %c0_i32_0 : i32, i32
  }
  func.func @transform_4(%arg0: i32) -> (i32, i32) {
    %c0_i32 = arith.constant 0 : i32
    %c0_i32_0 = arith.constant 0 : i32
    %c0_i32_1 = arith.constant 0 : i32
    return %c0_i32, %c0_i32_0 : i32, i32
  }
  func.func @transform_5(%arg0: i32) -> (i32, i32) {
    %c0_i32 = arith.constant 0 : i32
    %c0_i32_0 = arith.constant 0 : i32
    %c0_i32_1 = arith.constant 0 : i32
    return %c0_i32, %c0_i32_0 : i32, i32
  }
  func.func @transform_6(%arg0: i32) -> (i32, i32) {
    %c0_i32 = arith.constant 0 : i32
    %c0_i32_0 = arith.constant 0 : i32
    %c0_i32_1 = arith.constant 0 : i32
    return %c0_i32, %c0_i32_0 : i32, i32
  }
  func.func @transform_7(%arg0: i32) -> (i32, i32) {
    %c0_i32 = arith.constant 0 : i32
    %c0_i32_0 = arith.constant 0 : i32
    return %arg0, %c0_i32 : i32, i32
  }
}

</mosaic_0001>

<llo_original>
// kernel: tpu_custom_call.1
$region0: #{tpu_custom_call.1}
  #allocation0 [shape = 'u32[]', space=smem, size = 0x4, offset = 0x4, fixed_abs, tag = 'smem constant byte address 0x4 - core index']
  #allocation1 [shape = 'u32[144,128]{1,0:T(1,128)}', space=vmem, size = 0x12000, scoped, tag = 'internal scratch']
  %s0 = inlined_call_operand.hbm [shape: f32[8,128], index: 0, kind: input, shape index: {}]
  %s1 = inlined_call_operand.hbm [shape: f32[128,128], index: 1, kind: input, shape index: {}]
  %s2 = inlined_call_operand.vmem [shape: f32[1,128], index: 2, kind: input, shape index: {}]
  %s3 = inlined_call_operand.hbm [shape: f32[128,128], index: 3, kind: input, shape index: {}]
  %s4 = inlined_call_operand.vmem [shape: f32[1,128], index: 4, kind: input, shape index: {}]
  %s5 = inlined_call_operand.hbm [shape: f32[128,128], index: 5, kind: input, shape index: {}]
  %s6 = inlined_call_operand.vmem [shape: f32[1,128], index: 6, kind: input, shape index: {}]
  %s7 = inlined_call_operand.hbm [shape: f32[8,128], index: 7, kind: output, shape index: {}]
  %s8 = sld [smem:[#allocation0]]
  $region54: #{tpu_custom_call.1} parent=0
    _
  %s10 = ssub.s32 1, %s8
  %s11 = scalar_select 0, %s10, %s8
  $region1: #{tpu_custom_call.1} parent=0
    #allocation2 [shape = 'u8[4096]{0}', space=vmem, size = 0x1000, scoped, tag = 'input window, operand 0, single buffered']
    #allocation3 [shape = 's32[1]{0}', space=sflag, size = 0x4, scoped, tag = 'scoped memory for tpu_custom_call.1']
    #allocation4 [shape = 's32[1]{0}', space=sflag, size = 0x4, scoped, tag = 'scoped memory for tpu_custom_call.1']
    #allocation5 [shape = 'u8[65536]{0}', space=vmem, size = 0x10000, scoped, tag = 'input window, operand 1, single buffered']
    #allocation6 [shape = 's32[1]{0}', space=sflag, size = 0x4, scoped, tag = 'scoped memory for tpu_custom_call.1']
    #allocation7 [shape = 'u8[65536]{0}', space=vmem, size = 0x10000, scoped, tag = 'input window, operand 3, single buffered']
    #allocation8 [shape = 'u8[65536]{0}', space=vmem, size = 0x10000, scoped, tag = 'input window, operand 5, single buffered']
    #allocation9 [shape = 's32[1]{0}', space=sflag, size = 0x4, scoped, tag = 'scoped memory for tpu_custom_call.1']
    #allocation10 [shape = 'u8[4096]{0}', space=vmem, size = 0x1000, scoped, tag = 'output window, operand 0, single buffered']
    %12 = vsyncpa [#allocation3], 0
    %13 = vsyncpa [#allocation6], 0
    %14 = vsyncpa [#allocation9], 0
    %15 = vsyncpa [#allocation4], 0
    // Predicated region
    $region2: #{tpu_custom_call.1} parent=1 // pred_check
      _
    $region3: #{tpu_custom_call.1} parent=1 // pred_check_branch
      %17 = sbr.rel (0) target = $region5
    $region4: #{tpu_custom_call.1} parent=1 // pred_region
      %s19 = ssub.s32 128, 128
      %20 = vsyncadd [#allocation3], %s19
      %s22 = sshll.u32 [#allocation2], 4
      %s23 = int_to_ptr.vmem [resolvable:$true] %s22
      %25 = dma.hbm_to_vmem [thread:$0]  %s0, 128, %s23, [#allocation3]
    $region5: #{tpu_custom_call.1} parent=1 // pred_fallthru
      _
    // Predicated region
    $region6: #{tpu_custom_call.1} parent=1 // pred_check
      _
    $region7: #{tpu_custom_call.1} parent=1 // pred_check_branch
      %27 = sbr.rel (0) target = $region9
    $region8: #{tpu_custom_call.1} parent=1 // pred_region
      %s29 = ssub.s32 2048, 2048
      %30 = vsyncadd [#allocation6], %s29
      %s31 = sshll.u32 [#allocation5], 4
      %s32 = int_to_ptr.vmem [resolvable:$true] %s31
      %37 = dma.hbm_to_vmem [thread:$0]  %s1, 2048, %s32, [#allocation6], 128, 128, 8
    $region9: #{tpu_custom_call.1} parent=1 // pred_fallthru
      _
    // Predicated region
    $region10: #{tpu_custom_call.1} parent=1 // pred_check
      _
    $region11: #{tpu_custom_call.1} parent=1 // pred_check_branch
      %39 = sbr.rel (0) target = $region13
    $region12: #{tpu_custom_call.1} parent=1 // pred_region
      _
    $region13: #{tpu_custom_call.1} parent=1 // pred_fallthru
      _
    // Predicated region
    $region14: #{tpu_custom_call.1} parent=1 // pred_check
      _
    $region15: #{tpu_custom_call.1} parent=1 // pred_check_branch
      %41 = sbr.rel (0) target = $region17
    $region16: #{tpu_custom_call.1} parent=1 // pred_region
      %s43 = ssub.s32 2048, 2048
      %44 = vsyncadd [#allocation6], %s43
      %s45 = sshll.u32 [#allocation7], 4
      %s46 = int_to_ptr.vmem [resolvable:$true] %s45
      %51 = dma.hbm_to_vmem [thread:$0]  %s3, 2048, %s46, [#allocation6], 128, 128, 8
    $region17: #{tpu_custom_call.1} parent=1 // pred_fallthru
      _
    // Predicated region
    $region18: #{tpu_custom_call.1} parent=1 // pred_check
      _
    $region19: #{tpu_custom_call.1} parent=1 // pred_check_branch
      %53 = sbr.rel (0) target = $region21
    $region20: #{tpu_custom_call.1} parent=1 // pred_region
      _
    $region21: #{tpu_custom_call.1} parent=1 // pred_fallthru
      _
    // Predicated region
    $region22: #{tpu_custom_call.1} parent=1 // pred_check
      _
    $region23: #{tpu_custom_call.1} parent=1 // pred_check_branch
      %55 = sbr.rel (0) target = $region25
    $region24: #{tpu_custom_call.1} parent=1 // pred_region
      %s57 = ssub.s32 2048, 2048
      %58 = vsyncadd [#allocation9], %s57
      %s59 = sshll.u32 [#allocation8], 4
      %s60 = int_to_ptr.vmem [resolvable:$true] %s59
      %65 = dma.hbm_to_vmem [thread:$0]  %s5, 2048, %s60, [#allocation9], 128, 128, 8
    $region25: #{tpu_custom_call.1} parent=1 // pred_fallthru
      _
    // Predicated region
    $region26: #{tpu_custom_call.1} parent=1 // pred_check
      _
    $region27: #{tpu_custom_call.1} parent=1 // pred_check_branch
      %67 = sbr.rel (0) target = $region29
    $region28: #{tpu_custom_call.1} parent=1 // pred_region
      _
    $region29: #{tpu_custom_call.1} parent=1 // pred_fallthru
      _
    // Predicated region
    $region30: #{tpu_custom_call.1} parent=1 // pred_check
      _
    $region31: #{tpu_custom_call.1} parent=1 // pred_check_branch
      %69 = sbr.rel (0) target = $region33
    $region32: #{tpu_custom_call.1} parent=1 // pred_region
      %70 = dma.done [#allocation3], 128
    $region33: #{tpu_custom_call.1} parent=1 // pred_fallthru
      _
    // Predicated region
    $region34: #{tpu_custom_call.1} parent=1 // pred_check
      _
    $region35: #{tpu_custom_call.1} parent=1 // pred_check_branch
      %72 = sbr.rel (0) target = $region37
    $region36: #{tpu_custom_call.1} parent=1 // pred_region
      %73 = dma.done [#allocation6], 2048
    $region37: #{tpu_custom_call.1} parent=1 // pred_fallthru
      _
    // Predicated region
    $region38: #{tpu_custom_call.1} parent=1 // pred_check
      _
    $region39: #{tpu_custom_call.1} parent=1 // pred_check_branch
      %75 = sbr.rel (0) target = $region41
    $region40: #{tpu_custom_call.1} parent=1 // pred_region
      %76 = dma.done [#allocation6], 2048
    $region41: #{tpu_custom_call.1} parent=1 // pred_fallthru
      _
    // Predicated region
    $region42: #{tpu_custom_call.1} parent=1 // pred_check
      _
    $region43: #{tpu_custom_call.1} parent=1 // pred_check_branch
      %78 = sbr.rel (0) target = $region45
    $region44: #{tpu_custom_call.1} parent=1 // pred_region
      %79 = dma.done [#allocation9], 2048
    $region45: #{tpu_custom_call.1} parent=1 // pred_fallthru
      _
    %v80 = vld [vmem:[#allocation2] sm:$0xff]
    %v81 = vld [vmem:[#allocation5] sm:$0xff]
    %v82 = vld [vmem:[#allocation5 + $0x8] sm:$0xff]
    %v83 = vld [vmem:[#allocation5 + $0x10] sm:$0xff]
    %v84 = vld [vmem:[#allocation5 + $0x18] sm:$0xff]
    %v85 = vld [vmem:[#allocation5 + $0x20] sm:$0xff]
    %v86 = vld [vmem:[#allocation5 + $0x28] sm:$0xff]
    %v87 = vld [vmem:[#allocation5 + $0x30] sm:$0xff]
    %v88 = vld [vmem:[#allocation5 + $0x38] sm:$0xff]
    %v89 = vld [vmem:[#allocation5 + $0x40] sm:$0xff]
    %v90 = vld [vmem:[#allocation5 + $0x48] sm:$0xff]
    %v91 = vld [vmem:[#allocation5 + $0x50] sm:$0xff]
    %v92 = vld [vmem:[#allocation5 + $0x58] sm:$0xff]
    %v93 = vld [vmem:[#allocation5 + $0x60] sm:$0xff]
    %v94 = vld [vmem:[#allocation5 + $0x68] sm:$0xff]
    %v95 = vld [vmem:[#allocation5 + $0x70] sm:$0xff]
    %v96 = vld [vmem:[#allocation5 + $0x78] sm:$0xff]
    %v97 = vld [vmem:[%s2] sm:$0x1]
    %v99 = vlaneseq
    %v100 = vshrl.u32 %v99, 7
    %v101 = vsub.s32 0, %v100
    %v102 = vrot.slane %v97, %v101
    %104 = vmatprep.subr.mxu0 0.0
    %105 = vmatpush1.msra.mxu0 %v81
    %106 = vmatprep.subr.mxu0 0.0
    %107 = vmatpush1.msra.mxu0 %v82
    %108 = vmatprep.subr.mxu0 0.0
    %109 = vmatpush1.msra.mxu0 %v83
    %110 = vmatprep.subr.mxu0 0.0
    %111 = vmatpush1.msra.mxu0 %v84
    %112 = vmatprep.subr.mxu0 0.0
    %113 = vmatpush1.msra.mxu0 %v85
    %114 = vmatprep.subr.mxu0 0.0
    %115 = vmatpush1.msra.mxu0 %v86
    %116 = vmatprep.subr.mxu0 0.0
    %117 = vmatpush1.msra.mxu0 %v87
    %118 = vmatprep.subr.mxu0 0.0
    %119 = vmatpush1.msra.mxu0 %v88
    %120 = vmatprep.subr.mxu0 0.0
    %121 = vmatpush1.msra.mxu0 %v89
    %122 = vmatprep.subr.mxu0 0.0
    %123 = vmatpush1.msra.mxu0 %v90
    %124 = vmatprep.subr.mxu0 0.0
    %125 = vmatpush1.msra.mxu0 %v91
    %126 = vmatprep.subr.mxu0 0.0
    %127 = vmatpush1.msra.mxu0 %v92
    %128 = vmatprep.subr.mxu0 0.0
    %129 = vmatpush1.msra.mxu0 %v93
    %130 = vmatprep.subr.mxu0 0.0
    %131 = vmatpush1.msra.mxu0 %v94
    %132 = vmatprep.subr.mxu0 0.0
    %133 = vmatpush1.msra.mxu0 %v95
    %134 = vmatprep.subr.mxu0 0.0
    %135 = vmatpush1.msra.mxu0 %v96
    %136 = vmatprep.subr.mxu0 0.0
    %137 = vmatpush1.msra.mxu0 0.0
    %138 = vmatprep.subr.mxu0 0.0
    %139 = vmatpush1.msra.mxu0 0.0
    %140 = vmatprep.subr.mxu0 0.0
    %141 = vmatpush1.msra.mxu0 0.0
    %142 = vmatprep.subr.mxu0 0.0
    %143 = vmatpush1.msra.mxu0 0.0
    %144 = vmatprep.subr.mxu0 0.0
    %145 = vmatpush1.msra.mxu0 0.0
    %146 = vmatprep.subr.mxu0 0.0
    %147 = vmatpush1.msra.mxu0 0.0
    %148 = vmatprep.subr.mxu0 0.0
    %149 = vmatpush1.msra.mxu0 0.0
    %150 = vmatprep.subr.mxu0 0.0
    %151 = vmatpush1.msra.mxu0 0.0
    %152 = vmatprep.subr.mxu0 0.0
    %153 = vmatpush1.msra.mxu0 0.0
    %154 = vmatprep.subr.mxu0 0.0
    %155 = vmatpush1.msra.mxu0 0.0
    %156 = vmatprep.subr.mxu0 0.0
    %157 = vmatpush1.msra.mxu0 0.0
    %158 = vmatprep.subr.mxu0 0.0
    %159 = vmatpush1.msra.mxu0 0.0
    %160 = vmatprep.subr.mxu0 0.0
    %161 = vmatpush1.msra.mxu0 0.0
    %162 = vmatprep.subr.mxu0 0.0
    %163 = vmatpush1.msra.mxu0 0.0
    %164 = vmatprep.subr.mxu0 0.0
    %165 = vmatpush1.msra.mxu0 0.0
    %166 = vmatprep.subr.mxu0 0.0
    %167 = vmatpush1.msra.mxu0 0.0
    %168 = vmatprep.mubr.f32.mxu0 0.0
    %169 = vmatmul.mubr.f32.gmra.mrb[0].mxu0 %v80
    %v170 = vpop.f32.mrb[0].mxu0
    %v171 = vadd.f32 %v102, %v170
    %v172 = vpop.f32.mrb[0].mxu0
    %173 = vdwg.mxu0
    %v174 = vmax.f32 %v171, 0.0
    %v175 = vld [vmem:[#allocation7] sm:$0xff]
    %v176 = vld [vmem:[#allocation7 + $0x8] sm:$0xff]
    %v177 = vld [vmem:[#allocation7 + $0x10] sm:$0xff]
    %v178 = vld [vmem:[#allocation7 + $0x18] sm:$0xff]
    %v179 = vld [vmem:[#allocation7 + $0x20] sm:$0xff]
    %v180 = vld [vmem:[#allocation7 + $0x28] sm:$0xff]
    %v181 = vld [vmem:[#allocation7 + $0x30] sm:$0xff]
    %v182 = vld [vmem:[#allocation7 + $0x38] sm:$0xff]
    %v183 = vld [vmem:[#allocation7 + $0x40] sm:$0xff]
    %v184 = vld [vmem:[#allocation7 + $0x48] sm:$0xff]
    %v185 = vld [vmem:[#allocation7 + $0x50] sm:$0xff]
    %v186 = vld [vmem:[#allocation7 + $0x58] sm:$0xff]
    %v187 = vld [vmem:[#allocation7 + $0x60] sm:$0xff]
    %v188 = vld [vmem:[#allocation7 + $0x68] sm:$0xff]
    %v189 = vld [vmem:[#allocation7 + $0x70] sm:$0xff]
    %v190 = vld [vmem:[#allocation7 + $0x78] sm:$0xff]
    %v191 = vld [vmem:[%s4] sm:$0x1]
    %v193 = vlaneseq
    %v194 = vshrl.u32 %v193, 7
    %v195 = vsub.s32 0, %v194
    %v196 = vrot.slane %v191, %v195
    %198 = vmatprep.subr.mxu0 0.0
    %199 = vmatpush1.msra.mxu0 %v175
    %200 = vmatprep.subr.mxu0 0.0
    %201 = vmatpush1.msra.mxu0 %v176
    %202 = vmatprep.subr.mxu0 0.0
    %203 = vmatpush1.msra.mxu0 %v177
    %204 = vmatprep.subr.mxu0 0.0
    %205 = vmatpush1.msra.mxu0 %v178
    %206 = vmatprep.subr.mxu0 0.0
    %207 = vmatpush1.msra.mxu0 %v179
    %208 = vmatprep.subr.mxu0 0.0
    %209 = vmatpush1.msra.mxu0 %v180
    %210 = vmatprep.subr.mxu0 0.0
    %211 = vmatpush1.msra.mxu0 %v181
    %212 = vmatprep.subr.mxu0 0.0
    %213 = vmatpush1.msra.mxu0 %v182
    %214 = vmatprep.subr.mxu0 0.0
    %215 = vmatpush1.msra.mxu0 %v183
    %216 = vmatprep.subr.mxu0 0.0
    %217 = vmatpush1.msra.mxu0 %v184
    %218 = vmatprep.subr.mxu0 0.0
    %219 = vmatpush1.msra.mxu0 %v185
    %220 = vmatprep.subr.mxu0 0.0
    %221 = vmatpush1.msra.mxu0 %v186
    %222 = vmatprep.subr.mxu0 0.0
    %223 = vmatpush1.msra.mxu0 %v187
    %224 = vmatprep.subr.mxu0 0.0
    %225 = vmatpush1.msra.mxu0 %v188
    %226 = vmatprep.subr.mxu0 0.0
    %227 = vmatpush1.msra.mxu0 %v189
    %228 = vmatprep.subr.mxu0 0.0
    %229 = vmatpush1.msra.mxu0 %v190
    %230 = vmatprep.subr.mxu0 0.0
    %231 = vmatpush1.msra.mxu0 0.0
    %232 = vmatprep.subr.mxu0 0.0
    %233 = vmatpush1.msra.mxu0 0.0
    %234 = vmatprep.subr.mxu0 0.0
    %235 = vmatpush1.msra.mxu0 0.0
    %236 = vmatprep.subr.mxu0 0.0
    %237 = vmatpush1.msra.mxu0 0.0
    %238 = vmatprep.subr.mxu0 0.0
    %239 = vmatpush1.msra.mxu0 0.0
    %240 = vmatprep.subr.mxu0 0.0
    %241 = vmatpush1.msra.mxu0 0.0
    %242 = vmatprep.subr.mxu0 0.0
    %243 = vmatpush1.msra.mxu0 0.0
    %244 = vmatprep.subr.mxu0 0.0
    %245 = vmatpush1.msra.mxu0 0.0
    %246 = vmatprep.subr.mxu0 0.0
    %247 = vmatpush1.msra.mxu0 0.0
    %248 = vmatprep.subr.mxu0 0.0
    %249 = vmatpush1.msra.mxu0 0.0
    %250 = vmatprep.subr.mxu0 0.0
    %251 = vmatpush1.msra.mxu0 0.0
    %252 = vmatprep.subr.mxu0 0.0
    %253 = vmatpush1.msra.mxu0 0.0
    %254 = vmatprep.subr.mxu0 0.0
    %255 = vmatpush1.msra.mxu0 0.0
    %256 = vmatprep.subr.mxu0 0.0
    %257 = vmatpush1.msra.mxu0 0.0
    %258 = vmatprep.subr.mxu0 0.0
    %259 = vmatpush1.msra.mxu0 0.0
    %260 = vmatprep.subr.mxu0 0.0
    %261 = vmatpush1.msra.mxu0 0.0
    %262 = vmatprep.mubr.f32.mxu0 0.0
    %263 = vmatmul.mubr.f32.gmra.mrb[0].mxu0 %v174
    %v264 = vpop.f32.mrb[0].mxu0
    %v265 = vadd.f32 %v196, %v264
    %v266 = vpop.f32.mrb[0].mxu0
    %267 = vdwg.mxu0
    %v268 = vmax.f32 %v265, 0.0
    %v269 = vld [vmem:[#allocation8] sm:$0xff]
    %v270 = vld [vmem:[#allocation8 + $0x8] sm:$0xff]
    %v271 = vld [vmem:[#allocation8 + $0x10] sm:$0xff]
    %v272 = vld [vmem:[#allocation8 + $0x18] sm:$0xff]
    %v273 = vld [vmem:[#allocation8 + $0x20] sm:$0xff]
    %v274 = vld [vmem:[#allocation8 + $0x28] sm:$0xff]
    %v275 = vld [vmem:[#allocation8 + $0x30] sm:$0xff]
    %v276 = vld [vmem:[#allocation8 + $0x38] sm:$0xff]
    %v277 = vld [vmem:[#allocation8 + $0x40] sm:$0xff]
    %v278 = vld [vmem:[#allocation8 + $0x48] sm:$0xff]
    %v279 = vld [vmem:[#allocation8 + $0x50] sm:$0xff]
    %v280 = vld [vmem:[#allocation8 + $0x58] sm:$0xff]
    %v281 = vld [vmem:[#allocation8 + $0x60] sm:$0xff]
    %v282 = vld [vmem:[#allocation8 + $0x68] sm:$0xff]
    %v283 = vld [vmem:[#allocation8 + $0x70] sm:$0xff]
    %v284 = vld [vmem:[#allocation8 + $0x78] sm:$0xff]
    %v285 = vld [vmem:[%s6] sm:$0x1]
    %v287 = vlaneseq
    %v288 = vshrl.u32 %v287, 7
    %v289 = vsub.s32 0, %v288
    %v290 = vrot.slane %v285, %v289
    %292 = vmatprep.subr.mxu0 0.0
    %293 = vmatpush1.msra.mxu0 %v269
    %294 = vmatprep.subr.mxu0 0.0
    %295 = vmatpush1.msra.mxu0 %v270
    %296 = vmatprep.subr.mxu0 0.0
    %297 = vmatpush1.msra.mxu0 %v271
    %298 = vmatprep.subr.mxu0 0.0
    %299 = vmatpush1.msra.mxu0 %v272
    %300 = vmatprep.subr.mxu0 0.0
    %301 = vmatpush1.msra.mxu0 %v273
    %302 = vmatprep.subr.mxu0 0.0
    %303 = vmatpush1.msra.mxu0 %v274
    %304 = vmatprep.subr.mxu0 0.0
    %305 = vmatpush1.msra.mxu0 %v275
    %306 = vmatprep.subr.mxu0 0.0
    %307 = vmatpush1.msra.mxu0 %v276
    %308 = vmatprep.subr.mxu0 0.0
    %309 = vmatpush1.msra.mxu0 %v277
    %310 = vmatprep.subr.mxu0 0.0
    %311 = vmatpush1.msra.mxu0 %v278
    %312 = vmatprep.subr.mxu0 0.0
    %313 = vmatpush1.msra.mxu0 %v279
    %314 = vmatprep.subr.mxu0 0.0
    %315 = vmatpush1.msra.mxu0 %v280
    %316 = vmatprep.subr.mxu0 0.0
    %317 = vmatpush1.msra.mxu0 %v281
    %318 = vmatprep.subr.mxu0 0.0
    %319 = vmatpush1.msra.mxu0 %v282
    %320 = vmatprep.subr.mxu0 0.0
    %321 = vmatpush1.msra.mxu0 %v283
    %322 = vmatprep.subr.mxu0 0.0
    %323 = vmatpush1.msra.mxu0 %v284
    %324 = vmatprep.subr.mxu0 0.0
    %325 = vmatpush1.msra.mxu0 0.0
    %326 = vmatprep.subr.mxu0 0.0
    %327 = vmatpush1.msra.mxu0 0.0
    %328 = vmatprep.subr.mxu0 0.0
    %329 = vmatpush1.msra.mxu0 0.0
    %330 = vmatprep.subr.mxu0 0.0
    %331 = vmatpush1.msra.mxu0 0.0
    %332 = vmatprep.subr.mxu0 0.0
    %333 = vmatpush1.msra.mxu0 0.0
    %334 = vmatprep.subr.mxu0 0.0
    %335 = vmatpush1.msra.mxu0 0.0
    %336 = vmatprep.subr.mxu0 0.0
    %337 = vmatpush1.msra.mxu0 0.0
    %338 = vmatprep.subr.mxu0 0.0
    %339 = vmatpush1.msra.mxu0 0.0
    %340 = vmatprep.subr.mxu0 0.0
    %341 = vmatpush1.msra.mxu0 0.0
    %342 = vmatprep.subr.mxu0 0.0
    %343 = vmatpush1.msra.mxu0 0.0
    %344 = vmatprep.subr.mxu0 0.0
    %345 = vmatpush1.msra.mxu0 0.0
    %346 = vmatprep.subr.mxu0 0.0
    %347 = vmatpush1.msra.mxu0 0.0
    %348 = vmatprep.subr.mxu0 0.0
    %349 = vmatpush1.msra.mxu0 0.0
    %350 = vmatprep.subr.mxu0 0.0
    %351 = vmatpush1.msra.mxu0 0.0
    %352 = vmatprep.subr.mxu0 0.0
    %353 = vmatpush1.msra.mxu0 0.0
    %354 = vmatprep.subr.mxu0 0.0
    %355 = vmatpush1.msra.mxu0 0.0
    %356 = vmatprep.mubr.f32.mxu0 0.0
    %357 = vmatmul.mubr.f32.gmra.mrb[0].mxu0 %v268
    %v358 = vpop.f32.mrb[0].mxu0
    %v359 = vadd.f32 %v290, %v358
    %v360 = vpop.f32.mrb[0].mxu0
    %361 = vdwg.mxu0
    %v362 = vmax.f32 %v359, 0.0
    %363 = vst [vmem:[#allocation10] sm:$0xff] %v362
    // Predicated region
    $region46: #{tpu_custom_call.1} parent=1 // pred_check
      _
    $region47: #{tpu_custom_call.1} parent=1 // pred_check_branch
      %365 = sbr.rel (0) target = $region49
    $region48: #{tpu_custom_call.1} parent=1 // pred_region
      %s367 = ssub.s32 128, 128
      %368 = vsyncadd [#allocation4], %s367
      %s370 = sshll.u32 [#allocation10], 4
      %s371 = int_to_ptr.vmem [resolvable:$true] %s370
      %373 = dma.vmem_to_hbm [thread:$0]  %s371, 128, %s7, [#allocation4]
    $region49: #{tpu_custom_call.1} parent=1 // pred_fallthru
      _
    // Predicated region
    $region50: #{tpu_custom_call.1} parent=1 // pred_check
      _
    $region51: #{tpu_custom_call.1} parent=1 // pred_check_branch
      %375 = sbr.rel (0) target = $region53
    $region52: #{tpu_custom_call.1} parent=1 // pred_region
      %376 = dma.done [#allocation4], 128
    $region53: #{tpu_custom_call.1} parent=1 // pred_fallthru
      _
    %377 = vsyncpa [#allocation3], 1
    %378 = vsyncpa [#allocation6], 1
    %379 = vsyncpa [#allocation9], 1
    %380 = vsyncpa [#allocation4], 1

// kernel: tpu_custom_call.1
$region0: #{tpu_custom_call.1}
  #allocation0 [shape = 'u32[]', space=smem, size = 0x4, offset = 0x4, fixed_abs, tag = 'smem constant byte address 0x4 - core index']
  #allocation1 [shape = 'u32[144,128]{1,0:T(1,128)}', space=vmem, size = 0x12000, scoped, tag = 'internal scratch']
  %s0 = inlined_call_operand.hbm [shape: f32[8,128], index: 0, kind: input, shape index: {}]
  %s1 = inlined_call_operand.hbm [shape: f32[128,128], index: 1, kind: input, shape index: {}]
  %s2 = inlined_call_operand.vmem [shape: f32[1,128], index: 2, kind: input, shape index: {}]
  %s3 = inlined_call_operand.hbm [shape: f32[128,128], index: 3, kind: input, shape index: {}]
  %s4 = inlined_call_operand.vmem [shape: f32[1,128], index: 4, kind: input, shape index: {}]
  %s5 = inlined_call_operand.hbm [shape: f32[128,128], index: 5, kind: input, shape index: {}]
  %s6 = inlined_call_operand.vmem [shape: f32[1,128], index: 6, kind: input, shape index: {}]
  %s7 = inlined_call_operand.hbm [shape: f32[8,128], index: 7, kind: output, shape index: {}]
  %s8 = sld [smem:[#allocation0]]
  $region54: #{tpu_custom_call.1} parent=0
    _
  %s10 = ssub.s32 1, %s8
  %s11 = scalar_select 0, %s10, %s8
  $region1: #{tpu_custom_call.1} parent=0
    #allocation2 [shape = 'u8[4096]{0}', space=vmem, size = 0x1000, scoped, tag = 'input window, operand 0, single buffered']
    #allocation3 [shape = 's32[1]{0}', space=sflag, size = 0x4, scoped, tag = 'scoped memory for tpu_custom_call.1']
    #allocation4 [shape = 's32[1]{0}', space=sflag, size = 0x4, scoped, tag = 'scoped memory for tpu_custom_call.1']
    #allocation5 [shape = 'u8[65536]{0}', space=vmem, size = 0x10000, scoped, tag = 'input window, operand 1, single buffered']
    #allocation6 [shape = 's32[1]{0}', space=sflag, size = 0x4, scoped, tag = 'scoped memory for tpu_custom_call.1']
    #allocation7 [shape = 'u8[65536]{0}', space=vmem, size = 0x10000, scoped, tag = 'input window, operand 3, single buffered']
    #allocation8 [shape = 'u8[65536]{0}', space=vmem, size = 0x10000, scoped, tag = 'input window, operand 5, single buffered']
    #allocation9 [shape = 's32[1]{0}', space=sflag, size = 0x4, scoped, tag = 'scoped memory for tpu_custom_call.1']
    #allocation10 [shape = 'u8[4096]{0}', space=vmem, size = 0x1000, scoped, tag = 'output window, operand 0, single buffered']
    %12 = vsyncpa [#allocation3], 0
    %13 = vsyncpa [#allocation6], 0
    %14 = vsyncpa [#allocation9], 0
    %15 = vsyncpa [#allocation4], 0
    // Predicated region
    $region2: #{tpu_custom_call.1} parent=1 // pred_check
      _
    $region3: #{tpu_custom_call.1} parent=1 // pred_check_branch
      %17 = sbr.rel (0) target = $region5
    $region4: #{tpu_custom_call.1} parent=1 // pred_region
      %s19 = ssub.s32 128, 128
      %20 = vsyncadd [#allocation3], %s19
      %s22 = sshll.u32 [#allocation2], 4
      %s23 = int_to_ptr.vmem [resolvable:$true] %s22
      %25 = dma.hbm_to_vmem [thread:$0]  %s0, 128, %s23, [#allocation3]
    $region5: #{tpu_custom_call.1} parent=1 // pred_fallthru
      _
    // Predicated region
    $region6: #{tpu_custom_call.1} parent=1 // pred_check
      _
    $region7: #{tpu_custom_call.1} parent=1 // pred_check_branch
      %27 = sbr.rel (0) target = $region9
    $region8: #{tpu_custom_call.1} parent=1 // pred_region
      %s29 = ssub.s32 2048, 2048
      %30 = vsyncadd [#allocation6], %s29
      %s31 = sshll.u32 [#allocation5], 4
      %s32 = int_to_ptr.vmem [resolvable:$true] %s31
      %37 = dma.hbm_to_vmem [thread:$0]  %s1, 2048, %s32, [#allocation6], 128, 128, 8
    $region9: #{tpu_custom_call.1} parent=1 // pred_fallthru
      _
    // Predicated region
    $region10: #{tpu_custom_call.1} parent=1 // pred_check
      _
    $region11: #{tpu_custom_call.1} parent=1 // pred_check_branch
      %39 = sbr.rel (0) target = $region13
    $region12: #{tpu_custom_call.1} parent=1 // pred_region
      _
    $region13: #{tpu_custom_call.1} parent=1 // pred_fallthru
      _
    // Predicated region
    $region14: #{tpu_custom_call.1} parent=1 // pred_check
      _
    $region15: #{tpu_custom_call.1} parent=1 // pred_check_branch
      %41 = sbr.rel (0) target = $region17
    $region16: #{tpu_custom_call.1} parent=1 // pred_region
      %s43 = ssub.s32 2048, 2048
      %44 = vsyncadd [#allocation6], %s43
      %s45 = sshll.u32 [#allocation7], 4
      %s46 = int_to_ptr.vmem [resolvable:$true] %s45
      %51 = dma.hbm_to_vmem [thread:$0]  %s3, 2048, %s46, [#allocation6], 128, 128, 8
    $region17: #{tpu_custom_call.1} parent=1 // pred_fallthru
      _
    // Predicated region
    $region18: #{tpu_custom_call.1} parent=1 // pred_check
      _
    $region19: #{tpu_custom_call.1} parent=1 // pred_check_branch
      %53 = sbr.rel (0) target = $region21
    $region20: #{tpu_custom_call.1} parent=1 // pred_region
      _
    $region21: #{tpu_custom_call.1} parent=1 // pred_fallthru
      _
    // Predicated region
    $region22: #{tpu_custom_call.1} parent=1 // pred_check
      _
    $region23: #{tpu_custom_call.1} parent=1 // pred_check_branch
      %55 = sbr.rel (0) target = $region25
    $region24: #{tpu_custom_call.1} parent=1 // pred_region
      %s57 = ssub.s32 2048, 2048
      %58 = vsyncadd [#allocation9], %s57
      %s59 = sshll.u32 [#allocation8], 4
      %s60 = int_to_ptr.vmem [resolvable:$true] %s59
      %65 = dma.hbm_to_vmem [thread:$0]  %s5, 2048, %s60, [#allocation9], 128, 128, 8
    $region25: #{tpu_custom_call.1} parent=1 // pred_fallthru
      _
    // Predicated region
    $region26: #{tpu_custom_call.1} parent=1 // pred_check
      _
    $region27: #{tpu_custom_call.1} parent=1 // pred_check_branch
      %67 = sbr.rel (0) target = $region29
    $region28: #{tpu_custom_call.1} parent=1 // pred_region
      _
    $region29: #{tpu_custom_call.1} parent=1 // pred_fallthru
      _
    // Predicated region
    $region30: #{tpu_custom_call.1} parent=1 // pred_check
      _
    $region31: #{tpu_custom_call.1} parent=1 // pred_check_branch
      %69 = sbr.rel (0) target = $region33
    $region32: #{tpu_custom_call.1} parent=1 // pred_region
      %70 = dma.done [#allocation3], 128
    $region33: #{tpu_custom_call.1} parent=1 // pred_fallthru
      _
    // Predicated region
    $region34: #{tpu_custom_call.1} parent=1 // pred_check
      _
    $region35: #{tpu_custom_call.1} parent=1 // pred_check_branch
      %72 = sbr.rel (0) target = $region37
    $region36: #{tpu_custom_call.1} parent=1 // pred_region
      %73 = dma.done [#allocation6], 2048
    $region37: #{tpu_custom_call.1} parent=1 // pred_fallthru
      _
    // Predicated region
    $region38: #{tpu_custom_call.1} parent=1 // pred_check
      _
    $region39: #{tpu_custom_call.1} parent=1 // pred_check_branch
      %75 = sbr.rel (0) target = $region41
    $region40: #{tpu_custom_call.1} parent=1 // pred_region
      %76 = dma.done [#allocation6], 2048
    $region41: #{tpu_custom_call.1} parent=1 // pred_fallthru
      _
    // Predicated region
    $region42: #{tpu_custom_call.1} parent=1 // pred_check
      _
    $region43: #{tpu_custom_call.1} parent=1 // pred_check_branch
      %78 = sbr.rel (0) target = $region45
    $region44: #{tpu_custom_call.1} parent=1 // pred_region
      %79 = dma.done [#allocation9], 2048
    $region45: #{tpu_custom_call.1} parent=1 // pred_fallthru
      _
    %v80 = vld [vmem:[#allocation2] sm:$0xff]
    %v81 = vld [vmem:[#allocation5] sm:$0xff]
    %v82 = vld [vmem:[#allocation5 + $0x8] sm:$0xff]
    %v83 = vld [vmem:[#allocation5 + $0x10] sm:$0xff]
    %v84 = vld [vmem:[#allocation5 + $0x18] sm:$0xff]
    %v85 = vld [vmem:[#allocation5 + $0x20] sm:$0xff]
    %v86 = vld [vmem:[#allocation5 + $0x28] sm:$0xff]
    %v87 = vld [vmem:[#allocation5 + $0x30] sm:$0xff]
    %v88 = vld [vmem:[#allocation5 + $0x38] sm:$0xff]
    %v89 = vld [vmem:[#allocation5 + $0x40] sm:$0xff]
    %v90 = vld [vmem:[#allocation5 + $0x48] sm:$0xff]
    %v91 = vld [vmem:[#allocation5 + $0x50] sm:$0xff]
    %v92 = vld [vmem:[#allocation5 + $0x58] sm:$0xff]
    %v93 = vld [vmem:[#allocation5 + $0x60] sm:$0xff]
    %v94 = vld [vmem:[#allocation5 + $0x68] sm:$0xff]
    %v95 = vld [vmem:[#allocation5 + $0x70] sm:$0xff]
    %v96 = vld [vmem:[#allocation5 + $0x78] sm:$0xff]
    %v97 = vld [vmem:[%s2] sm:$0x1]
    %v99 = vlaneseq
    %v100 = vshrl.u32 %v99, 7
    %v101 = vsub.s32 0, %v100
    %v102 = vrot.slane %v97, %v101
    %104 = vmatprep.subr.mxu0 0.0
    %105 = vmatpush1.msra.mxu0 %v81
    %106 = vmatprep.subr.mxu0 0.0
    %107 = vmatpush1.msra.mxu0 %v82
    %108 = vmatprep.subr.mxu0 0.0
    %109 = vmatpush1.msra.mxu0 %v83
    %110 = vmatprep.subr.mxu0 0.0
    %111 = vmatpush1.msra.mxu0 %v84
    %112 = vmatprep.subr.mxu0 0.0
    %113 = vmatpush1.msra.mxu0 %v85
    %114 = vmatprep.subr.mxu0 0.0
    %115 = vmatpush1.msra.mxu0 %v86
    %116 = vmatprep.subr.mxu0 0.0
    %117 = vmatpush1.msra.mxu0 %v87
    %118 = vmatprep.subr.mxu0 0.0
    %119 = vmatpush1.msra.mxu0 %v88
    %120 = vmatprep.subr.mxu0 0.0
    %121 = vmatpush1.msra.mxu0 %v89
    %122 = vmatprep.subr.mxu0 0.0
    %123 = vmatpush1.msra.mxu0 %v90
    %124 = vmatprep.subr.mxu0 0.0
    %125 = vmatpush1.msra.mxu0 %v91
    %126 = vmatprep.subr.mxu0 0.0
    %127 = vmatpush1.msra.mxu0 %v92
    %128 = vmatprep.subr.mxu0 0.0
    %129 = vmatpush1.msra.mxu0 %v93
    %130 = vmatprep.subr.mxu0 0.0
    %131 = vmatpush1.msra.mxu0 %v94
    %132 = vmatprep.subr.mxu0 0.0
    %133 = vmatpush1.msra.mxu0 %v95
    %134 = vmatprep.subr.mxu0 0.0
    %135 = vmatpush1.msra.mxu0 %v96
    %136 = vmatprep.subr.mxu0 0.0
    %137 = vmatpush1.msra.mxu0 0.0
    %138 = vmatprep.subr.mxu0 0.0
    %139 = vmatpush1.msra.mxu0 0.0
    %140 = vmatprep.subr.mxu0 0.0
    %141 = vmatpush1.msra.mxu0 0.0
    %142 = vmatprep.subr.mxu0 0.0
    %143 = vmatpush1.msra.mxu0 0.0
    %144 = vmatprep.subr.mxu0 0.0
    %145 = vmatpush1.msra.mxu0 0.0
    %146 = vmatprep.subr.mxu0 0.0
    %147 = vmatpush1.msra.mxu0 0.0
    %148 = vmatprep.subr.mxu0 0.0
    %149 = vmatpush1.msra.mxu0 0.0
    %150 = vmatprep.subr.mxu0 0.0
    %151 = vmatpush1.msra.mxu0 0.0
    %152 = vmatprep.subr.mxu0 0.0
    %153 = vmatpush1.msra.mxu0 0.0
    %154 = vmatprep.subr.mxu0 0.0
    %155 = vmatpush1.msra.mxu0 0.0
    %156 = vmatprep.subr.mxu0 0.0
    %157 = vmatpush1.msra.mxu0 0.0
    %158 = vmatprep.subr.mxu0 0.0
    %159 = vmatpush1.msra.mxu0 0.0
    %160 = vmatprep.subr.mxu0 0.0
    %161 = vmatpush1.msra.mxu0 0.0
    %162 = vmatprep.subr.mxu0 0.0
    %163 = vmatpush1.msra.mxu0 0.0
    %164 = vmatprep.subr.mxu0 0.0
    %165 = vmatpush1.msra.mxu0 0.0
    %166 = vmatprep.subr.mxu0 0.0
    %167 = vmatpush1.msra.mxu0 0.0
    %168 = vmatprep.mubr.f32.mxu0 0.0
    %169 = vmatmul.mubr.f32.gmra.mrb[0].mxu0 %v80
    %v170 = vpop.f32.mrb[0].mxu0
    %v171 = vadd.f32 %v102, %v170
    %v172 = vpop.f32.mrb[0].mxu0
    %173 = vdwg.mxu0
    %v174 = vmax.f32 %v171, 0.0
    %v175 = vld [vmem:[#allocation7] sm:$0xff]
    %v176 = vld [vmem:[#allocation7 + $0x8] sm:$0xff]
    %v177 = vld [vmem:[#allocation7 + $0x10] sm:$0xff]
    %v178 = vld [vmem:[#allocation7 + $0x18] sm:$0xff]
    %v179 = vld [vmem:[#allocation7 + $0x20] sm:$0xff]
    %v180 = vld [vmem:[#allocation7 + $0x28] sm:$0xff]
    %v181 = vld [vmem:[#allocation7 + $0x30] sm:$0xff]
    %v182 = vld [vmem:[#allocation7 + $0x38] sm:$0xff]
    %v183 = vld [vmem:[#allocation7 + $0x40] sm:$0xff]
    %v184 = vld [vmem:[#allocation7 + $0x48] sm:$0xff]
    %v185 = vld [vmem:[#allocation7 + $0x50] sm:$0xff]
    %v186 = vld [vmem:[#allocation7 + $0x58] sm:$0xff]
    %v187 = vld [vmem:[#allocation7 + $0x60] sm:$0xff]
    %v188 = vld [vmem:[#allocation7 + $0x68] sm:$0xff]
    %v189 = vld [vmem:[#allocation7 + $0x70] sm:$0xff]
    %v190 = vld [vmem:[#allocation7 + $0x78] sm:$0xff]
    %v191 = vld [vmem:[%s4] sm:$0x1]
    %v193 = vlaneseq
    %v194 = vshrl.u32 %v193, 7
    %v195 = vsub.s32 0, %v194
    %v196 = vrot.slane %v191, %v195
    %198 = vmatprep.subr.mxu0 0.0
    %199 = vmatpush1.msra.mxu0 %v175
    %200 = vmatprep.subr.mxu0 0.0
    %201 = vmatpush1.msra.mxu0 %v176
    %202 = vmatprep.subr.mxu0 0.0
    %203 = vmatpush1.msra.mxu0 %v177
    %204 = vmatprep.subr.mxu0 0.0
    %205 = vmatpush1.msra.mxu0 %v178
    %206 = vmatprep.subr.mxu0 0.0
    %207 = vmatpush1.msra.mxu0 %v179
    %208 = vmatprep.subr.mxu0 0.0
    %209 = vmatpush1.msra.mxu0 %v180
    %210 = vmatprep.subr.mxu0 0.0
    %211 = vmatpush1.msra.mxu0 %v181
    %212 = vmatprep.subr.mxu0 0.0
    %213 = vmatpush1.msra.mxu0 %v182
    %214 = vmatprep.subr.mxu0 0.0
    %215 = vmatpush1.msra.mxu0 %v183
    %216 = vmatprep.subr.mxu0 0.0
    %217 = vmatpush1.msra.mxu0 %v184
    %218 = vmatprep.subr.mxu0 0.0
    %219 = vmatpush1.msra.mxu0 %v185
    %220 = vmatprep.subr.mxu0 0.0
    %221 = vmatpush1.msra.mxu0 %v186
    %222 = vmatprep.subr.mxu0 0.0
    %223 = vmatpush1.msra.mxu0 %v187
    %224 = vmatprep.subr.mxu0 0.0
    %225 = vmatpush1.msra.mxu0 %v188
    %226 = vmatprep.subr.mxu0 0.0
    %227 = vmatpush1.msra.mxu0 %v189
    %228 = vmatprep.subr.mxu0 0.0
    %229 = vmatpush1.msra.mxu0 %v190
    %230 = vmatprep.subr.mxu0 0.0
    %231 = vmatpush1.msra.mxu0 0.0
    %232 = vmatprep.subr.mxu0 0.0
    %233 = vmatpush1.msra.mxu0 0.0
    %234 = vmatprep.subr.mxu0 0.0
    %235 = vmatpush1.msra.mxu0 0.0
    %236 = vmatprep.subr.mxu0 0.0
    %237 = vmatpush1.msra.mxu0 0.0
    %238 = vmatprep.subr.mxu0 0.0
    %239 = vmatpush1.msra.mxu0 0.0
    %240 = vmatprep.subr.mxu0 0.0
    %241 = vmatpush1.msra.mxu0 0.0
    %242 = vmatprep.subr.mxu0 0.0
    %243 = vmatpush1.msra.mxu0 0.0
    %244 = vmatprep.subr.mxu0 0.0
    %245 = vmatpush1.msra.mxu0 0.0
    %246 = vmatprep.subr.mxu0 0.0
    %247 = vmatpush1.msra.mxu0 0.0
    %248 = vmatprep.subr.mxu0 0.0
    %249 = vmatpush1.msra.mxu0 0.0
    %250 = vmatprep.subr.mxu0 0.0
    %251 = vmatpush1.msra.mxu0 0.0
    %252 = vmatprep.subr.mxu0 0.0
    %253 = vmatpush1.msra.mxu0 0.0
    %254 = vmatprep.subr.mxu0 0.0
    %255 = vmatpush1.msra.mxu0 0.0
    %256 = vmatprep.subr.mxu0 0.0
    %257 = vmatpush1.msra.mxu0 0.0
    %258 = vmatprep.subr.mxu0 0.0
    %259 = vmatpush1.msra.mxu0 0.0
    %260 = vmatprep.subr.mxu0 0.0
    %261 = vmatpush1.msra.mxu0 0.0
    %262 = vmatprep.mubr.f32.mxu0 0.0
    %263 = vmatmul.mubr.f32.gmra.mrb[0].mxu0 %v174
    %v264 = vpop.f32.mrb[0].mxu0
    %v265 = vadd.f32 %v196, %v264
    %v266 = vpop.f32.mrb[0].mxu0
    %267 = vdwg.mxu0
    %v268 = vmax.f32 %v265, 0.0
    %v269 = vld [vmem:[#allocation8] sm:$0xff]
    %v270 = vld [vmem:[#allocation8 + $0x8] sm:$0xff]
    %v271 = vld [vmem:[#allocation8 + $0x10] sm:$0xff]
    %v272 = vld [vmem:[#allocation8 + $0x18] sm:$0xff]
    %v273 = vld [vmem:[#allocation8 + $0x20] sm:$0xff]
    %v274 = vld [vmem:[#allocation8 + $0x28] sm:$0xff]
    %v275 = vld [vmem:[#allocation8 + $0x30] sm:$0xff]
    %v276 = vld [vmem:[#allocation8 + $0x38] sm:$0xff]
    %v277 = vld [vmem:[#allocation8 + $0x40] sm:$0xff]
    %v278 = vld [vmem:[#allocation8 + $0x48] sm:$0xff]
    %v279 = vld [vmem:[#allocation8 + $0x50] sm:$0xff]
    %v280 = vld [vmem:[#allocation8 + $0x58] sm:$0xff]
    %v281 = vld [vmem:[#allocation8 + $0x60] sm:$0xff]
    %v282 = vld [vmem:[#allocation8 + $0x68] sm:$0xff]
    %v283 = vld [vmem:[#allocation8 + $0x70] sm:$0xff]
    %v284 = vld [vmem:[#allocation8 + $0x78] sm:$0xff]
    %v285 = vld [vmem:[%s6] sm:$0x1]
    %v287 = vlaneseq
    %v288 = vshrl.u32 %v287, 7
    %v289 = vsub.s32 0, %v288
    %v290 = vrot.slane %v285, %v289
    %292 = vmatprep.subr.mxu0 0.0
    %293 = vmatpush1.msra.mxu0 %v269
    %294 = vmatprep.subr.mxu0 0.0
    %295 = vmatpush1.msra.mxu0 %v270
    %296 = vmatprep.subr.mxu0 0.0
    %297 = vmatpush1.msra.mxu0 %v271
    %298 = vmatprep.subr.mxu0 0.0
    %299 = vmatpush1.msra.mxu0 %v272
    %300 = vmatprep.subr.mxu0 0.0
    %301 = vmatpush1.msra.mxu0 %v273
    %302 = vmatprep.subr.mxu0 0.0
    %303 = vmatpush1.msra.mxu0 %v274
    %304 = vmatprep.subr.mxu0 0.0
    %305 = vmatpush1.msra.mxu0 %v275
    %306 = vmatprep.subr.mxu0 0.0
    %307 = vmatpush1.msra.mxu0 %v276
    %308 = vmatprep.subr.mxu0 0.0
    %309 = vmatpush1.msra.mxu0 %v277
    %310 = vmatprep.subr.mxu0 0.0
    %311 = vmatpush1.msra.mxu0 %v278
    %312 = vmatprep.subr.mxu0 0.0
    %313 = vmatpush1.msra.mxu0 %v279
    %314 = vmatprep.subr.mxu0 0.0
    %315 = vmatpush1.msra.mxu0 %v280
    %316 = vmatprep.subr.mxu0 0.0
    %317 = vmatpush1.msra.mxu0 %v281
    %318 = vmatprep.subr.mxu0 0.0
    %319 = vmatpush1.msra.mxu0 %v282
    %320 = vmatprep.subr.mxu0 0.0
    %321 = vmatpush1.msra.mxu0 %v283
    %322 = vmatprep.subr.mxu0 0.0
    %323 = vmatpush1.msra.mxu0 %v284
    %324 = vmatprep.subr.mxu0 0.0
    %325 = vmatpush1.msra.mxu0 0.0
    %326 = vmatprep.subr.mxu0 0.0
    %327 = vmatpush1.msra.mxu0 0.0
    %328 = vmatprep.subr.mxu0 0.0
    %329 = vmatpush1.msra.mxu0 0.0
    %330 = vmatprep.subr.mxu0 0.0
    %331 = vmatpush1.msra.mxu0 0.0
    %332 = vmatprep.subr.mxu0 0.0
    %333 = vmatpush1.msra.mxu0 0.0
    %334 = vmatprep.subr.mxu0 0.0
    %335 = vmatpush1.msra.mxu0 0.0
    %336 = vmatprep.subr.mxu0 0.0
    %337 = vmatpush1.msra.mxu0 0.0
    %338 = vmatprep.subr.mxu0 0.0
    %339 = vmatpush1.msra.mxu0 0.0
    %340 = vmatprep.subr.mxu0 0.0
    %341 = vmatpush1.msra.mxu0 0.0
    %342 = vmatprep.subr.mxu0 0.0
    %343 = vmatpush1.msra.mxu0 0.0
    %344 = vmatprep.subr.mxu0 0.0
    %345 = vmatpush1.msra.mxu0 0.0
    %346 = vmatprep.subr.mxu0 0.0
    %347 = vmatpush1.msra.mxu0 0.0
    %348 = vmatprep.subr.mxu0 0.0
    %349 = vmatpush1.msra.mxu0 0.0
    %350 = vmatprep.subr.mxu0 0.0
    %351 = vmatpush1.msra.mxu0 0.0
    %352 = vmatprep.subr.mxu0 0.0
    %353 = vmatpush1.msra.mxu0 0.0
    %354 = vmatprep.subr.mxu0 0.0
    %355 = vmatpush1.msra.mxu0 0.0
    %356 = vmatprep.mubr.f32.mxu0 0.0
    %357 = vmatmul.mubr.f32.gmra.mrb[0].mxu0 %v268
    %v358 = vpop.f32.mrb[0].mxu0
    %v359 = vadd.f32 %v290, %v358
    %v360 = vpop.f32.mrb[0].mxu0
    %361 = vdwg.mxu0
    %v362 = vmax.f32 %v359, 0.0
    %363 = vst [vmem:[#allocation10] sm:$0xff] %v362
    // Predicated region
    $region46: #{tpu_custom_call.1} parent=1 // pred_check
      _
    $region47: #{tpu_custom_call.1} parent=1 // pred_check_branch
      %365 = sbr.rel (0) target = $region49
    $region48: #{tpu_custom_call.1} parent=1 // pred_region
      %s367 = ssub.s32 128, 128
      %368 = vsyncadd [#allocation4], %s367
      %s370 = sshll.u32 [#allocation10], 4
      %s371 = int_to_ptr.vmem [resolvable:$true] %s370
      %373 = dma.vmem_to_hbm [thread:$0]  %s371, 128, %s7, [#allocation4]
    $region49: #{tpu_custom_call.1} parent=1 // pred_fallthru
      _
    // Predicated region
    $region50: #{tpu_custom_call.1} parent=1 // pred_check
      _
    $region51: #{tpu_custom_call.1} parent=1 // pred_check_branch
      %375 = sbr.rel (0) target = $region53
    $region52: #{tpu_custom_call.1} parent=1 // pred_region
      %376 = dma.done [#allocation4], 128
    $region53: #{tpu_custom_call.1} parent=1 // pred_fallthru
      _
    %377 = vsyncpa [#allocation3], 1
    %378 = vsyncpa [#allocation6], 1
    %379 = vsyncpa [#allocation9], 1
    %380 = vsyncpa [#allocation4], 1

</llo_original>
